<compile_context>
chip_gen: v6e
topology: v6e:2x2x1
jax: 0.10.0
libtpu: 0.0.40
codegen_flags: <defaults>
</compile_context>

<pallas_src>
import functools
import numpy as np

import jax
import jax.numpy as jnp
from jax.experimental import pallas as pl
from jax.experimental.pallas import tpu as pltpu

K = 7      # MaxPool2d kernel_size
RAD = 3    # MaxPool2d padding (window radius), implicit -inf padding as in torch


def _nms_kernel(rel_ref, rep_ref, mask_ref, *, H, W, rel_thr, rep_thr):
    """One (R, W) slab per grid step, R = TB*H rows covering TB whole planes.

    rel_ref, rep_ref: (R, W) native dtype
    mask_ref:         (R, W) int8 (1 where local 7x7 max passes both thresholds)
    """
    rep = rep_ref[...]
    rel = rel_ref[...]
    dt = rep.dtype
    neg_inf = jnp.asarray(-jnp.inf, dt)
    R = rep.shape[0]

    col = jax.lax.broadcasted_iota(jnp.int32, (R, W), 1)        # lane index (W)
    prow = jax.lax.broadcasted_iota(jnp.int32, (R, W), 0) % H    # row within plane

    # Hoisted boundary-valid masks (image edge AND plane boundary), computed once.
    w_p1 = col < (W - 1)
    w_p2 = col < (W - 2)
    w_m1 = col >= 1
    w_m2 = col >= 2
    h_p1 = prow < (H - 1)
    h_p2 = prow < (H - 2)
    h_m1 = prow >= 1
    h_m2 = prow >= 2

    def axis_max7(x, axis, size, m_p1, m_p2, m_m1, m_m2):
        """Max over the centered 7-window along `axis` with -inf boundaries.

        Dilated separable decomposition: forward 4-window (shifts +1,+2) and
        backward 4-window (shifts -1,-2); their max covers offsets [-3, +3].
        Shift +d is an XLU roll by (-d) % size; invalid wrapped positions are
        masked to -inf via the precomputed masks.
        """
        def sh(v, d):
            return pltpu.roll(v, shift=(-d) % size, axis=axis)
        s1 = jnp.maximum(x, jnp.where(m_p1, sh(x, 1), neg_inf))
        fwd = jnp.maximum(s1, jnp.where(m_p2, sh(s1, 2), neg_inf))   # max x[i..i+3]
        t1 = jnp.maximum(x, jnp.where(m_m1, sh(x, -1), neg_inf))
        bwd = jnp.maximum(t1, jnp.where(m_m2, sh(t1, -2), neg_inf))  # max x[i-3..i]
        return jnp.maximum(fwd, bwd)                                 # max x[i-3..i+3]

    m = axis_max7(rep, 1, W, w_p1, w_p2, w_m1, w_m2)   # 7-max along W (lanes)
    m = axis_max7(m, 0, R, h_p1, h_p2, h_m1, h_m2)     # 7-max along H (sublanes)

    maxima = ((rep == m)
              & (rep >= jnp.asarray(rep_thr, dt))
              & (rel >= jnp.asarray(rel_thr, dt)))
    mask_ref[...] = maxima.astype(jnp.int8)


def _arch_params():
    """(block budget bytes, keep >=2 grid steps, vmem_limit_bytes) per TPU gen."""
    kind = ""
    try:
        kind = jax.devices()[0].device_kind.lower()
    except Exception:
        pass
    single_core = ("v5e" in kind) or ("v5 lite" in kind) or ("v6" in kind)
    if single_core:
        # 1 TC/chip, 128 MiB physical VMEM: no megacore benefit, grow blocks
        # and raise the scoped-VMEM limit.
        return (24 << 20), False, (64 << 20)
    # v7x (2 TCs, 64 MiB physical / 32 MiB default scoped VMEM) or unknown:
    # keep >=2 parallel grid steps for megacore and a conservative budget.
    return (16 << 20), True, None


def _choose_tb(bc, h, w, itemsize, budget_bytes, need_two_steps):
    """Planes per grid step.

    Stay inside a double-buffered VMEM budget, keep >=2 grid steps only where
    megacore sharding pays off (v7x), and keep the block's second-minor dim
    int8-tile aligned (multiple of 32) unless the block covers the full extent.
    """
    per_plane = h * w * (2 * itemsize + 1) * 2   # rel + rep + int8 mask, 2 buffers
    cap = max(1, budget_bytes // per_plane)
    if need_two_steps and bc >= 2:
        cap = min(cap, max(1, bc // 2))

    best = None
    for d in range(1, bc + 1):
        if bc % d == 0 and d <= cap and (d == bc or (d * h) % 32 == 0):
            best = d
    if best is None:
        # No aligned divisor fits the soft budget: take the smallest aligned one.
        for d in range(1, bc + 1):
            if bc % d == 0 and ((d * h) % 32 == 0 or d == bc):
                best = d
                break
    return best


def nms_mask(reliability, repeatability, rel_thr=0.7, rep_thr=0.7):
    """Pallas-computed maxima mask (int8) of shape (B, C, H, W)."""
    assert reliability.shape == repeatability.shape
    B, C, H, W = repeatability.shape
    BC = B * C
    itemsize = repeatability.dtype.itemsize

    # Metadata-only flatten to a lane/sublane-dense 2-D slab; NO dtype upcast.
    rel2 = reliability.reshape(BC * H, W)
    rep2 = repeatability.reshape(BC * H, W)

    budget, need_two, vmem_limit = _arch_params()
    TB = _choose_tb(BC, H, W, itemsize, budget, need_two)
    R = TB * H

    kernel = functools.partial(_nms_kernel, H=H, W=W,
                               rel_thr=float(rel_thr), rep_thr=float(rep_thr))

    cost = pl.CostEstimate(
        flops=32 * BC * H * W,                               # ~32 VPU ops / elem
        transcendentals=0,
        bytes_accessed=BC * H * W * (2 * itemsize + 1),      # rel + rep + i8 mask
    )

    # TODO(synk): if deployed feature maps have W not a multiple of 128, fold W
    # into the sublane axis (or pad lanes) in this wrapper so stores stay dense.
    mask = pl.pallas_call(
        kernel,
        out_shape=jax.ShapeDtypeStruct((BC * H, W), jnp.int8),
        grid_spec=pltpu.PrefetchScalarGridSpec(
            num_scalar_prefetch=0,
            grid=(BC // TB,),
            in_specs=[
                pl.BlockSpec((R, W), lambda i: (i, 0)),
                pl.BlockSpec((R, W), lambda i: (i, 0)),
            ],
            out_specs=pl.BlockSpec((R, W), lambda i: (i, 0)),
        ),
        compiler_params=pltpu.CompilerParams(
            dimension_semantics=("parallel",),
            vmem_limit_bytes=vmem_limit),
        cost_estimate=cost,
    )(rel2, rep2)

    return mask.reshape(B, C, H, W)


def non_max_suppression(reliability_list, repeatability_list,
                        rel_thr=0.7, rep_thr=0.7):
    """Equivalent of NonMaxSuppression.forward: returns (2, N) [h; w] coords."""
    assert len(reliability_list) == len(repeatability_list) == 1
    reliability, repeatability = reliability_list[0], repeatability_list[0]

    mask = nms_mask(reliability, repeatability, rel_thr, rep_thr)

    # TODO(synk): `nonzero()` has a data-dependent output shape; no fixed-shape
    # Pallas equivalent, so the coordinate extraction is done on host.
    idx = np.nonzero(np.asarray(mask))          # (b, c, h, w) index arrays
    coords = jnp.stack([jnp.asarray(idx[2]), jnp.asarray(idx[3])], axis=0)
    return coords                                # shape (2, N), rows = (h, w)


def _reference_mask(reliability, repeatability, rel_thr=0.7, rep_thr=0.7):
    """Pure-JAX reference of the maxima mask (for correctness check)."""
    B, C, H, W = repeatability.shape
    rep = repeatability
    rel = reliability
    rep_pad = jnp.pad(rep, ((0, 0), (0, 0), (RAD, RAD), (RAD, RAD)),
                      constant_values=-jnp.inf)
    m = jnp.full_like(rep, -jnp.inf)
    for dy in range(K):
        for dx in range(K):
            m = jnp.maximum(m, rep_pad[:, :, dy:dy + H, dx:dx + W])
    return ((rep == m)
            & (rep >= jnp.asarray(rep_thr, rep.dtype))
            & (rel >= jnp.asarray(rel_thr, rel.dtype))).astype(jnp.int8)


if __name__ == "__main__":
    key = jax.random.PRNGKey(0)
    k1, k2 = jax.random.split(key)

    # Small, lane-dense demo shapes (W = 128 keeps output stores full-width).
    B, C, H, W = 2, 1, 32, 128
    reliability = jax.random.uniform(k1, (B, C, H, W), dtype=jnp.float32)
    repeatability = jax.random.uniform(k2, (B, C, H, W), dtype=jnp.float32)

    mask = nms_mask(reliability, repeatability)
    jax.block_until_ready(mask)

    ref = _reference_mask(reliability, repeatability)
    assert np.array_equal(np.asarray(mask), np.asarray(ref)), "mask mismatch (f32)"

    # Also exercise the native-bf16 path (no wrapper upcast).
    rel_bf = reliability.astype(jnp.bfloat16)
    rep_bf = repeatability.astype(jnp.bfloat16)
    mask_bf = nms_mask(rel_bf, rep_bf)
    jax.block_until_ready(mask_bf)
    ref_bf = _reference_mask(rel_bf, rep_bf)
    assert np.array_equal(np.asarray(mask_bf), np.asarray(ref_bf)), "mask mismatch (bf16)"

    coords = non_max_suppression([reliability], [repeatability])
    jax.block_until_ready(coords)
    assert coords.shape[0] == 2

    print("KERNEL_OK")
</pallas_src>

<mosaic_0001>
module attributes {stable_mosaic.version = 11 : i64} {
  func.func @_nms_kernel(%arg0: i32, %arg1: memref<32x128xf32, #tpu.memory_space<vmem>>, %arg2: memref<32x128xf32, #tpu.memory_space<vmem>>, %arg3: memref<32x128xi8, #tpu.memory_space<vmem>>) attributes {dimension_semantics = [#tpu.dimension_semantics<parallel>], iteration_bounds = array<i64: 2>, scalar_prefetch = 0 : i64, scratch_operands = 0 : i64, tpu.core_type = #tpu.core_type<tc>, window_params = [{transform_indices = @transform_0, window_bounds = array<i64: 32, 128>}, {transform_indices = @transform_1, window_bounds = array<i64: 32, 128>}, {transform_indices = @transform_2, window_bounds = array<i64: 32, 128>}]} {
    %c0 = arith.constant 0 : index
    %c0_0 = arith.constant 0 : index
    %0 = vector.load %arg2[%c0, %c0_0] : memref<32x128xf32, #tpu.memory_space<vmem>>, vector<32x128xf32>
    %c0_1 = arith.constant 0 : index
    %c0_2 = arith.constant 0 : index
    %1 = vector.load %arg1[%c0_1, %c0_2] : memref<32x128xf32, #tpu.memory_space<vmem>>, vector<32x128xf32>
    %2 = tpu.iota {dimensions = array<i32: 1>} : vector<32x128xi32>
    %3 = tpu.iota {dimensions = array<i32: 0>} : vector<32x128xi32>
    %c32_i32 = arith.constant 32 : i32
    %c0_i32 = arith.constant 0 : i32
    %4 = arith.cmpi eq, %c32_i32, %c0_i32 : i32
    %c1_i32 = arith.constant 1 : i32
    %5 = arith.select %4, %c1_i32, %c32_i32 : i32
    %6 = vector.broadcast %5 : i32 to vector<32x128xi32>
    %7 = arith.remsi %3, %6 : vector<32x128xi32>
    %c0_i32_3 = arith.constant 0 : i32
    %8 = vector.broadcast %c0_i32_3 : i32 to vector<32x128xi32>
    %9 = arith.cmpi ne, %7, %8 : vector<32x128xi32>
    %c0_i32_4 = arith.constant 0 : i32
    %10 = vector.broadcast %c0_i32_4 : i32 to vector<32x128xi32>
    %11 = arith.cmpi slt, %7, %10 : vector<32x128xi32>
    %c0_i32_5 = arith.constant 0 : i32
    %12 = arith.cmpi slt, %5, %c0_i32_5 : i32
    %13 = vector.broadcast %12 : i1 to vector<32x128xi1>
    %14 = vector.broadcast %13 : vector<32x128xi1> to vector<32x128xi1>
    %15 = arith.xori %11, %14 : vector<32x128xi1>
    %16 = arith.andi %15, %9 : vector<32x128xi1>
    %17 = vector.broadcast %5 : i32 to vector<32x128xi32>
    %18 = arith.addi %7, %17 : vector<32x128xi32>
    %19 = arith.select %16, %18, %7 : vector<32x128xi1>, vector<32x128xi32>
    %c127_i32 = arith.constant 127 : i32
    %20 = vector.broadcast %c127_i32 : i32 to vector<32x128xi32>
    %21 = arith.cmpi slt, %2, %20 : vector<32x128xi32>
    %c126_i32 = arith.constant 126 : i32
    %22 = vector.broadcast %c126_i32 : i32 to vector<32x128xi32>
    %23 = arith.cmpi slt, %2, %22 : vector<32x128xi32>
    %c1_i32_6 = arith.constant 1 : i32
    %24 = vector.broadcast %c1_i32_6 : i32 to vector<32x128xi32>
    %25 = arith.cmpi sge, %2, %24 : vector<32x128xi32>
    %c2_i32 = arith.constant 2 : i32
    %26 = vector.broadcast %c2_i32 : i32 to vector<32x128xi32>
    %27 = arith.cmpi sge, %2, %26 : vector<32x128xi32>
    %c31_i32 = arith.constant 31 : i32
    %28 = vector.broadcast %c31_i32 : i32 to vector<32x128xi32>
    %29 = arith.cmpi slt, %19, %28 : vector<32x128xi32>
    %c30_i32 = arith.constant 30 : i32
    %30 = vector.broadcast %c30_i32 : i32 to vector<32x128xi32>
    %31 = arith.cmpi slt, %19, %30 : vector<32x128xi32>
    %c1_i32_7 = arith.constant 1 : i32
    %32 = vector.broadcast %c1_i32_7 : i32 to vector<32x128xi32>
    %33 = arith.cmpi sge, %19, %32 : vector<32x128xi32>
    %c2_i32_8 = arith.constant 2 : i32
    %34 = vector.broadcast %c2_i32_8 : i32 to vector<32x128xi32>
    %35 = arith.cmpi sge, %19, %34 : vector<32x128xi32>
    %c127_i32_9 = arith.constant 127 : i32
    %36 = tpu.dynamic_rotate %0 by %c127_i32_9 dim 1 : vector<32x128xf32>, i32 -> vector<32x128xf32>
    %cst = arith.constant 0xFF800000 : f32
    %37 = vector.broadcast %cst : f32 to vector<32x128xf32>
    %38 = arith.select %21, %36, %37 : vector<32x128xi1>, vector<32x128xf32>
    %39 = arith.maximumf %0, %38 : vector<32x128xf32>
    %c126_i32_10 = arith.constant 126 : i32
    %40 = tpu.dynamic_rotate %39 by %c126_i32_10 dim 1 : vector<32x128xf32>, i32 -> vector<32x128xf32>
    %cst_11 = arith.constant 0xFF800000 : f32
    %41 = vector.broadcast %cst_11 : f32 to vector<32x128xf32>
    %42 = arith.select %23, %40, %41 : vector<32x128xi1>, vector<32x128xf32>
    %43 = arith.maximumf %39, %42 : vector<32x128xf32>
    %c1_i32_12 = arith.constant 1 : i32
    %44 = tpu.dynamic_rotate %0 by %c1_i32_12 dim 1 : vector<32x128xf32>, i32 -> vector<32x128xf32>
    %cst_13 = arith.constant 0xFF800000 : f32
    %45 = vector.broadcast %cst_13 : f32 to vector<32x128xf32>
    %46 = arith.select %25, %44, %45 : vector<32x128xi1>, vector<32x128xf32>
    %47 = arith.maximumf %0, %46 : vector<32x128xf32>
    %c2_i32_14 = arith.constant 2 : i32
    %48 = tpu.dynamic_rotate %47 by %c2_i32_14 dim 1 : vector<32x128xf32>, i32 -> vector<32x128xf32>
    %cst_15 = arith.constant 0xFF800000 : f32
    %49 = vector.broadcast %cst_15 : f32 to vector<32x128xf32>
    %50 = arith.select %27, %48, %49 : vector<32x128xi1>, vector<32x128xf32>
    %51 = arith.maximumf %47, %50 : vector<32x128xf32>
    %52 = arith.maximumf %43, %51 : vector<32x128xf32>
    %c31_i32_16 = arith.constant 31 : i32
    %53 = tpu.dynamic_rotate %52 by %c31_i32_16 dim 0 : vector<32x128xf32>, i32 -> vector<32x128xf32>
    %cst_17 = arith.constant 0xFF800000 : f32
    %54 = vector.broadcast %cst_17 : f32 to vector<32x128xf32>
    %55 = arith.select %29, %53, %54 : vector<32x128xi1>, vector<32x128xf32>
    %56 = arith.maximumf %52, %55 : vector<32x128xf32>
    %c30_i32_18 = arith.constant 30 : i32
    %57 = tpu.dynamic_rotate %56 by %c30_i32_18 dim 0 : vector<32x128xf32>, i32 -> vector<32x128xf32>
    %cst_19 = arith.constant 0xFF800000 : f32
    %58 = vector.broadcast %cst_19 : f32 to vector<32x128xf32>
    %59 = arith.select %31, %57, %58 : vector<32x128xi1>, vector<32x128xf32>
    %60 = arith.maximumf %56, %59 : vector<32x128xf32>
    %c1_i32_20 = arith.constant 1 : i32
    %61 = tpu.dynamic_rotate %52 by %c1_i32_20 dim 0 : vector<32x128xf32>, i32 -> vector<32x128xf32>
    %cst_21 = arith.constant 0xFF800000 : f32
    %62 = vector.broadcast %cst_21 : f32 to vector<32x128xf32>
    %63 = arith.select %33, %61, %62 : vector<32x128xi1>, vector<32x128xf32>
    %64 = arith.maximumf %52, %63 : vector<32x128xf32>
    %c2_i32_22 = arith.constant 2 : i32
    %65 = tpu.dynamic_rotate %64 by %c2_i32_22 dim 0 : vector<32x128xf32>, i32 -> vector<32x128xf32>
    %cst_23 = arith.constant 0xFF800000 : f32
    %66 = vector.broadcast %cst_23 : f32 to vector<32x128xf32>
    %67 = arith.select %35, %65, %66 : vector<32x128xi1>, vector<32x128xf32>
    %68 = arith.maximumf %64, %67 : vector<32x128xf32>
    %69 = arith.maximumf %60, %68 : vector<32x128xf32>
    %70 = arith.cmpf oeq, %0, %69 : vector<32x128xf32>
    %cst_24 = arith.constant 0.699999988 : f32
    %71 = vector.broadcast %cst_24 : f32 to vector<32x128xf32>
    %72 = arith.cmpf oge, %0, %71 : vector<32x128xf32>
    %73 = arith.andi %70, %72 : vector<32x128xi1>
    %cst_25 = arith.constant 0.699999988 : f32
    %74 = vector.broadcast %cst_25 : f32 to vector<32x128xf32>
    %75 = arith.cmpf oge, %1, %74 : vector<32x128xf32>
    %76 = arith.andi %73, %75 : vector<32x128xi1>
    %77 = arith.extui %76 : vector<32x128xi1> to vector<32x128xi8>
    %c0_26 = arith.constant 0 : index
    %c0_27 = arith.constant 0 : index
    %78 = vector.load %arg3[%c0_26, %c0_27] : memref<32x128xi8, #tpu.memory_space<vmem>>, vector<32x128xi8>
    tpu.vector_store %arg3[%c0_26, %c0_27], %77 {strides = array<i32>} : memref<32x128xi8, #tpu.memory_space<vmem>>, vector<32x128xi8>,
    return
  }
  func.func @transform_0(%arg0: i32) -> (i32, i32) {
    %c0_i32 = arith.constant 0 : i32
    %c0_i32_0 = arith.constant 0 : i32
    return %arg0, %c0_i32 : i32, i32
  }
  func.func @transform_1(%arg0: i32) -> (i32, i32) {
    %c0_i32 = arith.constant 0 : i32
    %c0_i32_0 = arith.constant 0 : i32
    return %arg0, %c0_i32 : i32, i32
  }
  func.func @transform_2(%arg0: i32) -> (i32, i32) {
    %c0_i32 = arith.constant 0 : i32
    %c0_i32_0 = arith.constant 0 : i32
    return %arg0, %c0_i32 : i32, i32
  }
}

</mosaic_0001>

<llo_original>
// kernel: tpu_custom_call.1
$region0: #{tpu_custom_call.1}
  #allocation0 [shape = 'u32[]', space=smem, size = 0x4, offset = 0x4, fixed_abs, tag = 'smem constant byte address 0x4 - core index']
  #allocation1 [shape = 'u32[144,128]{1,0:T(1,128)}', space=vmem, size = 0x12000, scoped, tag = 'internal scratch']
  %s0 = inlined_call_operand.hbm [shape: f32[64,128], index: 0, kind: input, shape index: {}]
  %s1 = inlined_call_operand.hbm [shape: f32[64,128], index: 1, kind: input, shape index: {}]
  %s2 = inlined_call_operand.hbm [shape: s8[64,128], index: 2, kind: output, shape index: {}]
  %s3 = sld [smem:[#allocation0]]
  $region49: #{tpu_custom_call.1} parent=0
    _
  %s5 = ssub.s32 1, %s3
  %s6 = scalar_select 0, %s5, %s3
  $region1: #{tpu_custom_call.1} parent=0
    #allocation2 [shape = 'u8[32768]{0}', space=vmem, size = 0x8000, scoped, tag = 'input window, operand 0']
    #allocation3 [shape = 's32[2]{0}', space=sflag, size = 0x8, scoped, tag = 'scoped memory for tpu_custom_call.1']
    #allocation4 [shape = 's32[2]{0}', space=sflag, size = 0x8, scoped, tag = 'scoped memory for tpu_custom_call.1']
    #allocation5 [shape = 'u8[32768]{0}', space=vmem, size = 0x8000, scoped, tag = 'input window, operand 1']
    #allocation6 [shape = 's32[2]{0}', space=sflag, size = 0x8, scoped, tag = 'scoped memory for tpu_custom_call.1']
    #allocation7 [shape = 'u8[8192]{0}', space=vmem, size = 0x2000, scoped, tag = 'output window, operand 0']
    %7 = vsyncpa [#allocation3], 0
    %s8 = scalar_lea.sflag [#allocation3], 1
    %9 = vsyncpa %s8, 0
    %10 = vsyncpa [#allocation6], 0
    %s11 = scalar_lea.sflag [#allocation6], 1
    %12 = vsyncpa %s11, 0
    %13 = vsyncpa [#allocation4], 0
    %s14 = scalar_lea.sflag [#allocation4], 1
    %15 = vsyncpa %s14, 0
    loop: start=0, step=1, limit=4
    $region2: #{tpu_custom_call.1} parent=1 // loop_pre_header
      _
    $region3: #{tpu_custom_call.1} parent=1 // loop_header
      %s17 = sphi 0, %s21
      %p18 = scmp.ge.s32.totalorder %s17, 4
      %s27 = sphi 0, %s29
      %s30 = sphi 0, %s27
      %s31 = sphi 0, %s30
      %s47 = sphi 0, %s31
      %s53 = sphi 0, %s55
      %s56 = sphi 0, %s53
      %s57 = sphi 0, %s56
      %s73 = sphi 0, %s57
      %s79 = sphi 0, %s81
      %s82 = sphi 0, %s79
      %s83 = sphi 0, %s82
      %s99 = sphi 0, %s83
    $region4: #{tpu_custom_call.1} parent=1 // loop_header_branch
      %20 = sbr.rel (%p18) target = $region8
    $region5: #{tpu_custom_call.1} parent=1 // loop_body
      %s22 = ssub.s32 %s17, 1
      %s23 = ssub.s32 %s17, 2
      %s24 = sadd.s32 %s17, 1
      %s25 = ssub.s32 %s17, %s24
      %p26 = scmp.eq.s32.totalorder %s25, 0
      %s28 = sadd.s32 %s27, 1
      %s29 = scalar_select %p26, %s27, %s28
      %p32 = pneg %p26
      %p33 = scmp.eq.s32.totalorder %s17, 1
      %p34 = por %p32, %p33
      %p35 = scmp.ne.s32.totalorder %s27, %s30
      %p36 = scmp.eq.s32.totalorder %s17, 0
      %p37 = por %p35, %p36
      %p38 = scmp.ne.s32.totalorder %s27, %s30
      %p39 = scmp.eq.s32.totalorder %s22, 1
      %p40 = por %p38, %p39
      %p41 = scmp.ne.s32.totalorder %s30, %s31
      %p42 = scmp.eq.s32.totalorder %s22, 0
      %p43 = por %p41, %p42
      %p44 = scmp.ne.s32.totalorder %s30, %s31
      %p45 = scmp.eq.s32.totalorder %s23, 1
      %p46 = por %p44, %p45
      %p48 = scmp.ne.s32.totalorder %s31, %s47
      %p49 = scmp.eq.s32.totalorder %s23, 0
      %p50 = por %p48, %p49
      %s51 = ssub.s32 %s17, %s24
      %p52 = scmp.eq.s32.totalorder %s51, 0
      %s54 = sadd.s32 %s53, 1
      %s55 = scalar_select %p52, %s53, %s54
      %p58 = pneg %p52
      %p59 = scmp.eq.s32.totalorder %s17, 1
      %p60 = por %p58, %p59
      %p61 = scmp.ne.s32.totalorder %s53, %s56
      %p62 = scmp.eq.s32.totalorder %s17, 0
      %p63 = por %p61, %p62
      %p64 = scmp.ne.s32.totalorder %s53, %s56
      %p65 = scmp.eq.s32.totalorder %s22, 1
      %p66 = por %p64, %p65
      %p67 = scmp.ne.s32.totalorder %s56, %s57
      %p68 = scmp.eq.s32.totalorder %s22, 0
      %p69 = por %p67, %p68
      %p70 = scmp.ne.s32.totalorder %s56, %s57
      %p71 = scmp.eq.s32.totalorder %s23, 1
      %p72 = por %p70, %p71
      %p74 = scmp.ne.s32.totalorder %s57, %s73
      %p75 = scmp.eq.s32.totalorder %s23, 0
      %p76 = por %p74, %p75
      %s77 = ssub.s32 %s17, %s24
      %p78 = scmp.eq.s32.totalorder %s77, 0
      %s80 = sadd.s32 %s79, 1
      %s81 = scalar_select %p78, %s79, %s80
      %p84 = pneg %p78
      %p85 = scmp.eq.s32.totalorder %s17, 1
      %p86 = por %p84, %p85
      %p87 = scmp.ne.s32.totalorder %s79, %s82
      %p88 = scmp.eq.s32.totalorder %s17, 0
      %p89 = por %p87, %p88
      %p90 = scmp.ne.s32.totalorder %s79, %s82
      %p91 = scmp.eq.s32.totalorder %s22, 1
      %p92 = por %p90, %p91
      %p93 = scmp.ne.s32.totalorder %s82, %s83
      %p94 = scmp.eq.s32.totalorder %s22, 0
      %p95 = por %p93, %p94
      %p96 = scmp.ne.s32.totalorder %s82, %s83
      %p97 = scmp.eq.s32.totalorder %s23, 1
      %p98 = por %p96, %p97
      %p100 = scmp.ne.s32.totalorder %s83, %s99
      %p101 = scmp.eq.s32.totalorder %s23, 0
      %p102 = por %p100, %p101
      %p103 = scmp.le.s32.totalorder 1, %s17
      %p104 = scmp.lt.s32.totalorder %s17, 3
      %p105 = pnand %p103, %p104
      %p106 = pneg %p105
      // Predicated region
      $region9: #{tpu_custom_call.1} parent=5 // pred_check
        _
      $region10: #{tpu_custom_call.1} parent=5 // pred_check_branch
        %108 = sbr.rel (%p105) target = $region12
      $region11: #{tpu_custom_call.1} parent=5 // pred_region
        %s109 = ssub.s32 %s17, 1
      $region12: #{tpu_custom_call.1} parent=5 // pred_fallthru
        _
      %p110 = scmp.lt.s32.totalorder %s17, 2
      // Predicated region
      $region13: #{tpu_custom_call.1} parent=5 // pred_check
        %p111 = pneg %p110
      $region14: #{tpu_custom_call.1} parent=5 // pred_check_branch
        %113 = sbr.rel (%p111) target = $region16
      $region15: #{tpu_custom_call.1} parent=5 // pred_region
        // Predicated region
        $region17: #{tpu_custom_call.1} parent=15 // pred_check
          %p114 = pneg %p37
        $region18: #{tpu_custom_call.1} parent=15 // pred_check_branch
          %116 = sbr.rel (%p114) target = $region20
        $region19: #{tpu_custom_call.1} parent=15 // pred_region
          %s117 = sand.u32 %s27, 1
          %s118 = scalar_lea.sflag [#allocation3], %s117
          %s119 = sand.u32 %s27, 1
          %s120 = smul.addr %s119, 32
          %s121 = scalar_lea.vmem [#allocation2], %s120
          %s122 = smul.u32 4, %s17
          %s124 = ssub.s32 512, 512
          %125 = vsyncadd %s118, %s124
          %s126 = smul.addr %s122, 128
          %s127 = scalar_lea.hbm %s0, %s126
          %s128 = sshll.u32 %s121, 4
          %s129 = int_to_ptr.vmem [resolvable:$true] %s128
          %134 = dma.hbm_to_vmem [thread:$0]  %s127, 512, %s129, %s118, 128, 128, 8
        $region20: #{tpu_custom_call.1} parent=15 // pred_fallthru
          _
        // Predicated region
        $region21: #{tpu_custom_call.1} parent=15 // pred_check
          %p135 = pneg %p63
        $region22: #{tpu_custom_call.1} parent=15 // pred_check_branch
          %137 = sbr.rel (%p135) target = $region24
        $region23: #{tpu_custom_call.1} parent=15 // pred_region
          %s138 = sand.u32 %s53, 1
          %s139 = scalar_lea.sflag [#allocation6], %s138
          %s140 = sand.u32 %s53, 1
          %s141 = smul.addr %s140, 32
          %s142 = scalar_lea.vmem [#allocation5], %s141
          %s143 = smul.u32 4, %s17
          %s145 = ssub.s32 512, 512
          %146 = vsyncadd %s139, %s145
          %s147 = smul.addr %s143, 128
          %s148 = scalar_lea.hbm %s1, %s147
          %s149 = sshll.u32 %s142, 4
          %s150 = int_to_ptr.vmem [resolvable:$true] %s149
          %155 = dma.hbm_to_vmem [thread:$0]  %s148, 512, %s150, %s139, 128, 128, 8
        $region24: #{tpu_custom_call.1} parent=15 // pred_fallthru
          _
      $region16: #{tpu_custom_call.1} parent=5 // pred_fallthru
        _
      %p156 = scmp.le.s32.totalorder 1, %s17
      %p157 = scmp.lt.s32.totalorder %s17, 3
      %p158 = pnand %p156, %p157
      %p159 = pneg %p158
      // Predicated region
      $region25: #{tpu_custom_call.1} parent=5 // pred_check
        _
      $region26: #{tpu_custom_call.1} parent=5 // pred_check_branch
        %161 = sbr.rel (%p158) target = $region28
      $region27: #{tpu_custom_call.1} parent=5 // pred_region
        %s162 = ssub.s32 %s17, 1
        %s163 = sand.u32 %s30, 1
        %s164 = scalar_lea.sflag [#allocation3], %s163
        %s165 = sand.u32 %s30, 1
        %s166 = smul.addr %s165, 32
        %s167 = scalar_lea.vmem [#allocation2], %s166
        // Predicated region
        $region29: #{tpu_custom_call.1} parent=27 // pred_check
          %p168 = pneg %p43
        $region30: #{tpu_custom_call.1} parent=27 // pred_check_branch
          %170 = sbr.rel (%p168) target = $region32
        $region31: #{tpu_custom_call.1} parent=27 // pred_region
          %171 = dma.done %s164, 512
        $region32: #{tpu_custom_call.1} parent=27 // pred_fallthru
          _
        %s172 = sand.u32 %s56, 1
        %s173 = scalar_lea.sflag [#allocation6], %s172
        %s174 = sand.u32 %s56, 1
        %s175 = smul.addr %s174, 32
        %s176 = scalar_lea.vmem [#allocation5], %s175
        // Predicated region
        $region33: #{tpu_custom_call.1} parent=27 // pred_check
          %p177 = pneg %p69
        $region34: #{tpu_custom_call.1} parent=27 // pred_check_branch
          %179 = sbr.rel (%p177) target = $region36
        $region35: #{tpu_custom_call.1} parent=27 // pred_region
          %180 = dma.done %s173, 512
        $region36: #{tpu_custom_call.1} parent=27 // pred_fallthru
          _
        %s181 = sand.u32 %s30, 1
        %s182 = scalar_lea.sflag [#allocation3], %s181
        %s183 = sand.u32 %s30, 1
        %s184 = smul.addr %s183, 32
        %s185 = scalar_lea.vmem [#allocation2], %s184
        %p186 = pneg %p43
        %p187 = pneg %p40
        %s188 = sand.u32 %s56, 1
        %s189 = scalar_lea.sflag [#allocation6], %s188
        %s190 = sand.u32 %s56, 1
        %s191 = smul.addr %s190, 32
        %s192 = scalar_lea.vmem [#allocation5], %s191
        %p193 = pneg %p69
        %p194 = pneg %p66
        %p195 = pneg %p95
        %p196 = pneg %p92
        %s197 = sand.u32 %s82, 1
        %s198 = scalar_lea.sflag [#allocation4], %s197
        %s199 = sand.u32 %s82, 1
        %s200 = smul.addr %s199, 8
        %s201 = scalar_lea.vmem [#allocation7], %s200
        %s202 = smul.u32 4, %s22
        %s203 = smul.u32 4, %s22
        %v206 = vld [vmem:[%s176] sm:$0xff]
        %v207 = vld [vmem:[%s176 + $0x8] sm:$0xff]
        %v208 = vld [vmem:[%s176 + $0x10] sm:$0xff]
        %v209 = vld [vmem:[%s176 + $0x18] sm:$0xff]
        %v210 = vld [vmem:[%s167] sm:$0xff]
        %v211 = vld [vmem:[%s167 + $0x8] sm:$0xff]
        %v212 = vld [vmem:[%s167 + $0x10] sm:$0xff]
        %v213 = vld [vmem:[%s167 + $0x18] sm:$0xff]
        %v214 = vlaneseq
        %v215 = vand.u32 %v214, 127
        %v216 = vlaneseq
        %v217 = vshrl.u32 %v216, 7
        %v218 = vadd.s32 %v217, 8
        %v219 = vadd.s32 %v217, 16
        %v220 = vadd.s32 %v217, 24
        %vm221 = vcmp.lt.s32.totalorder %v217, 0
        %v222 = vsub.s32 0, %v217
        %v223 = vsel %vm221, %v222, %v217
        %v224 = vshrl.u32 %v223, 5
        %v225 = vand.u32 %v223, 31
        %v226 = vsub.s32 0, %v225
        %v227 = vsel %vm221, %v226, %v225
        %vm228 = vcmp.lt.s32.totalorder %v218, 0
        %v229 = vsub.s32 0, %v218
        %v230 = vsel %vm228, %v229, %v218
        %v231 = vshrl.u32 %v230, 5
        %v232 = vand.u32 %v230, 31
        %v233 = vsub.s32 0, %v232
        %v234 = vsel %vm228, %v233, %v232
        %vm235 = vcmp.lt.s32.totalorder %v219, 0
        %v236 = vsub.s32 0, %v219
        %v237 = vsel %vm235, %v236, %v219
        %v238 = vshrl.u32 %v237, 5
        %v239 = vand.u32 %v237, 31
        %v240 = vsub.s32 0, %v239
        %v241 = vsel %vm235, %v240, %v239
        %vm242 = vcmp.lt.s32.totalorder %v220, 0
        %v243 = vsub.s32 0, %v220
        %v244 = vsel %vm242, %v243, %v220
        %v245 = vshrl.u32 %v244, 5
        %v246 = vand.u32 %v244, 31
        %v247 = vsub.s32 0, %v246
        %v248 = vsel %vm242, %v247, %v246
        %vm249 = vcmp.ne.s32.totalorder %v227, 0
        %vm250 = vcmp.ne.s32.totalorder %v234, 0
        %vm251 = vcmp.ne.s32.totalorder %v241, 0
        %vm252 = vcmp.ne.s32.totalorder %v248, 0
        %vm253 = vcmp.lt.s32.totalorder %v227, 0
        %vm254 = vcmp.lt.s32.totalorder %v234, 0
        %vm255 = vcmp.lt.s32.totalorder %v241, 0
        %vm256 = vcmp.lt.s32.totalorder %v248, 0
        %vm257 = vmand %vm253, %vm249
        %vm258 = vmand %vm254, %vm250
        %vm259 = vmand %vm255, %vm251
        %vm260 = vmand %vm256, %vm252
        %v261 = vadd.s32 %v227, 32
        %v262 = vadd.s32 %v234, 32
        %v263 = vadd.s32 %v241, 32
        %v264 = vadd.s32 %v248, 32
        %v265 = vsel %vm257, %v261, %v227
        %v266 = vsel %vm258, %v262, %v234
        %v267 = vsel %vm259, %v263, %v241
        %v268 = vsel %vm260, %v264, %v248
        %vm269 = vcmp.lt.s32.totalorder %v215, 127
        %vm270 = vcmp.lt.s32.totalorder %v215, 126
        %vm271 = vcmp.ge.s32.totalorder %v215, 1
        %vm272 = vcmp.ge.s32.totalorder %v215, 2
        %vm273 = vcmp.lt.s32.totalorder %v265, 31
        %vm274 = vcmp.lt.s32.totalorder %v266, 31
        %vm275 = vcmp.lt.s32.totalorder %v267, 31
        %vm276 = vcmp.lt.s32.totalorder %v268, 31
        %vm277 = vcmp.lt.s32.totalorder %v265, 30
        %vm278 = vcmp.lt.s32.totalorder %v266, 30
        %vm279 = vcmp.lt.s32.totalorder %v267, 30
        %vm280 = vcmp.lt.s32.totalorder %v268, 30
        %vm281 = vcmp.ge.s32.totalorder %v265, 1
        %vm282 = vcmp.ge.s32.totalorder %v266, 1
        %vm283 = vcmp.ge.s32.totalorder %v267, 1
        %vm284 = vcmp.ge.s32.totalorder %v268, 1
        %vm285 = vcmp.ge.s32.totalorder %v265, 2
        %vm286 = vcmp.ge.s32.totalorder %v266, 2
        %vm287 = vcmp.ge.s32.totalorder %v267, 2
        %vm288 = vcmp.ge.s32.totalorder %v268, 2
        %289 = vrot.lane.b32.xlu0 %v206, 127
        %v290 = vpop.permute.xlu0 %289
        %291 = vrot.lane.b32.xlu0 %v207, 127
        %v292 = vpop.permute.xlu0 %291
        %293 = vrot.lane.b32.xlu0 %v208, 127
        %v294 = vpop.permute.xlu0 %293
        %295 = vrot.lane.b32.xlu0 %v209, 127
        %v296 = vpop.permute.xlu0 %295
        %v297 = vsel %vm269, %v290, -inf
        %v298 = vsel %vm269, %v292, -inf
        %v299 = vsel %vm269, %v294, -inf
        %v300 = vsel %vm269, %v296, -inf
        %v301 = vmax.f32 %v206, %v297
        %v302 = vmax.f32 %v207, %v298
        %v303 = vmax.f32 %v208, %v299
        %v304 = vmax.f32 %v209, %v300
        %305 = vrot.lane.b32.xlu0 %v301, 126
        %v306 = vpop.permute.xlu0 %305
        %307 = vrot.lane.b32.xlu0 %v302, 126
        %v308 = vpop.permute.xlu0 %307
        %309 = vrot.lane.b32.xlu0 %v303, 126
        %v310 = vpop.permute.xlu0 %309
        %311 = vrot.lane.b32.xlu0 %v304, 126
        %v312 = vpop.permute.xlu0 %311
        %v313 = vsel %vm270, %v306, -inf
        %v314 = vsel %vm270, %v308, -inf
        %v315 = vsel %vm270, %v310, -inf
        %v316 = vsel %vm270, %v312, -inf
        %v317 = vmax.f32 %v301, %v313
        %v318 = vmax.f32 %v302, %v314
        %v319 = vmax.f32 %v303, %v315
        %v320 = vmax.f32 %v304, %v316
        %321 = vrot.lane.b32.xlu0 %v206, 1
        %v322 = vpop.permute.xlu0 %321
        %323 = vrot.lane.b32.xlu0 %v207, 1
        %v324 = vpop.permute.xlu0 %323
        %325 = vrot.lane.b32.xlu0 %v208, 1
        %v326 = vpop.permute.xlu0 %325
        %327 = vrot.lane.b32.xlu0 %v209, 1
        %v328 = vpop.permute.xlu0 %327
        %v329 = vsel %vm271, %v322, -inf
        %v330 = vsel %vm271, %v324, -inf
        %v331 = vsel %vm271, %v326, -inf
        %v332 = vsel %vm271, %v328, -inf
        %v333 = vmax.f32 %v206, %v329
        %v334 = vmax.f32 %v207, %v330
        %v335 = vmax.f32 %v208, %v331
        %v336 = vmax.f32 %v209, %v332
        %337 = vrot.lane.b32.xlu0 %v333, 2
        %v338 = vpop.permute.xlu0 %337
        %339 = vrot.lane.b32.xlu0 %v334, 2
        %v340 = vpop.permute.xlu0 %339
        %341 = vrot.lane.b32.xlu0 %v335, 2
        %v342 = vpop.permute.xlu0 %341
        %343 = vrot.lane.b32.xlu0 %v336, 2
        %v344 = vpop.permute.xlu0 %343
        %v345 = vsel %vm272, %v338, -inf
        %v346 = vsel %vm272, %v340, -inf
        %v347 = vsel %vm272, %v342, -inf
        %v348 = vsel %vm272, %v344, -inf
        %v349 = vmax.f32 %v333, %v345
        %v350 = vmax.f32 %v334, %v346
        %v351 = vmax.f32 %v335, %v347
        %v352 = vmax.f32 %v336, %v348
        %v353 = vmax.f32 %v317, %v349
        %v354 = vmax.f32 %v318, %v350
        %v355 = vmax.f32 %v319, %v351
        %v356 = vmax.f32 %v320, %v352
        %v357 = vrot.slane %v353, 1
        %v358 = vrot.slane %v354, 1
        %v359 = vrot.slane %v355, 1
        %v360 = vrot.slane %v356, 1
        %vm361 = vcmp.lt.s32.totalorder %v217, 7
        %v362 = vsel %vm361, %v359, %v360
        %v363 = vsel %vm361, %v358, %v359
        %v364 = vsel %vm361, %v357, %v358
        %v365 = vsel %vm361, %v360, %v357
        %v366 = vsel %vm273, %v364, -inf
        %v367 = vsel %vm274, %v363, -inf
        %v368 = vsel %vm275, %v362, -inf
        %v369 = vsel %vm276, %v365, -inf
        %v370 = vmax.f32 %v353, %v366
        %v371 = vmax.f32 %v354, %v367
        %v372 = vmax.f32 %v355, %v368
        %v373 = vmax.f32 %v356, %v369
        %v374 = vrot.slane %v370, 2
        %v375 = vrot.slane %v371, 2
        %v376 = vrot.slane %v372, 2
        %v377 = vrot.slane %v373, 2
        %vm378 = vcmp.lt.s32.totalorder %v217, 6
        %v379 = vsel %vm378, %v376, %v377
        %v380 = vsel %vm378, %v375, %v376
        %v381 = vsel %vm378, %v374, %v375
        %v382 = vsel %vm378, %v377, %v374
        %v383 = vsel %vm277, %v381, -inf
        %v384 = vsel %vm278, %v380, -inf
        %v385 = vsel %vm279, %v379, -inf
        %v386 = vsel %vm280, %v382, -inf
        %v387 = vmax.f32 %v370, %v383
        %v388 = vmax.f32 %v371, %v384
        %v389 = vmax.f32 %v372, %v385
        %v390 = vmax.f32 %v373, %v386
        %v391 = vrot.slane %v353, 7
        %v392 = vrot.slane %v354, 7
        %v393 = vrot.slane %v355, 7
        %v394 = vrot.slane %v356, 7
        %vm395 = vcmp.lt.s32.totalorder %v217, 1
        %v396 = vsel %vm395, %v393, %v394
        %v397 = vsel %vm395, %v392, %v393
        %v398 = vsel %vm395, %v391, %v392
        %v399 = vsel %vm395, %v394, %v391
        %v400 = vsel %vm281, %v399, -inf
        %v401 = vsel %vm282, %v398, -inf
        %v402 = vsel %vm283, %v397, -inf
        %v403 = vsel %vm284, %v396, -inf
        %v404 = vmax.f32 %v353, %v400
        %v405 = vmax.f32 %v354, %v401
        %v406 = vmax.f32 %v355, %v402
        %v407 = vmax.f32 %v356, %v403
        %v408 = vrot.slane %v404, 6
        %v409 = vrot.slane %v405, 6
        %v410 = vrot.slane %v406, 6
        %v411 = vrot.slane %v407, 6
        %vm412 = vcmp.lt.s32.totalorder %v217, 2
        %v413 = vsel %vm412, %v410, %v411
        %v414 = vsel %vm412, %v409, %v410
        %v415 = vsel %vm412, %v408, %v409
        %v416 = vsel %vm412, %v411, %v408
        %v417 = vsel %vm285, %v416, -inf
        %v418 = vsel %vm286, %v415, -inf
        %v419 = vsel %vm287, %v414, -inf
        %v420 = vsel %vm288, %v413, -inf
        %v421 = vmax.f32 %v404, %v417
        %v422 = vmax.f32 %v405, %v418
        %v423 = vmax.f32 %v406, %v419
        %v424 = vmax.f32 %v407, %v420
        %v425 = vmax.f32 %v387, %v421
        %v426 = vmax.f32 %v388, %v422
        %v427 = vmax.f32 %v389, %v423
        %v428 = vmax.f32 %v390, %v424
        %vm429 = vcmp.eq.f32.partialorder %v206, %v425
        %vm430 = vcmp.eq.f32.partialorder %v207, %v426
        %vm431 = vcmp.eq.f32.partialorder %v208, %v427
        %vm432 = vcmp.eq.f32.partialorder %v209, %v428
        %vm433 = vcmp.ge.f32.partialorder %v206, 0.7
        %vm434 = vcmp.ge.f32.partialorder %v207, 0.7
        %vm435 = vcmp.ge.f32.partialorder %v208, 0.7
        %vm436 = vcmp.ge.f32.partialorder %v209, 0.7
        %vm437 = vmand %vm429, %vm433
        %vm438 = vmand %vm430, %vm434
        %vm439 = vmand %vm431, %vm435
        %vm440 = vmand %vm432, %vm436
        %vm441 = vcmp.ge.f32.partialorder %v210, 0.7
        %vm442 = vcmp.ge.f32.partialorder %v211, 0.7
        %vm443 = vcmp.ge.f32.partialorder %v212, 0.7
        %vm444 = vcmp.ge.f32.partialorder %v213, 0.7
        %vm445 = vmand %vm437, %vm441
        %vm446 = vmand %vm438, %vm442
        %vm447 = vmand %vm439, %vm443
        %vm448 = vmand %vm440, %vm444
        %vm449 = vmpackc.low %vm446, %vm445
        %vm450 = vmpackc.low %vm448, %vm447
        %vm451 = vmpackc.even %vm450, %vm449
        %v452 = vsel %vm451, 16843009, 0
        %453 = vst [vmem:[%s201] sm:$0xff] %v452
        %s454 = sand.u32 %s82, 1
        %s455 = scalar_lea.sflag [#allocation4], %s454
        %s456 = sand.u32 %s82, 1
        %s457 = smul.addr %s456, 8
        %s458 = scalar_lea.vmem [#allocation7], %s457
        // Predicated region
        $region37: #{tpu_custom_call.1} parent=27 // pred_check
          %p459 = pneg %p92
        $region38: #{tpu_custom_call.1} parent=27 // pred_check_branch
          %461 = sbr.rel (%p459) target = $region40
        $region39: #{tpu_custom_call.1} parent=27 // pred_region
          %s463 = ssub.s32 128, 128
          %464 = vsyncadd %s455, %s463
          %s465 = smul.addr %s22, 128
          %s466 = scalar_lea.hbm %s2, %s465
          %s468 = sshll.u32 %s458, 4
          %s469 = int_to_ptr.vmem [resolvable:$true] %s468
          %471 = dma.vmem_to_hbm [thread:$0]  %s469, 128, %s466, %s455
        $region40: #{tpu_custom_call.1} parent=27 // pred_fallthru
          _
      $region28: #{tpu_custom_call.1} parent=5 // pred_fallthru
        _
      %p472 = scmp.le.s32.totalorder 2, %s17
      // Predicated region
      $region41: #{tpu_custom_call.1} parent=5 // pred_check
        %p473 = pneg %p472
      $region42: #{tpu_custom_call.1} parent=5 // pred_check_branch
        %475 = sbr.rel (%p473) target = $region44
      $region43: #{tpu_custom_call.1} parent=5 // pred_region
        %s476 = ssub.s32 %s17, 2
        // Predicated region
        $region45: #{tpu_custom_call.1} parent=43 // pred_check
          %p477 = pneg %p98
        $region46: #{tpu_custom_call.1} parent=43 // pred_check_branch
          %479 = sbr.rel (%p477) target = $region48
        $region47: #{tpu_custom_call.1} parent=43 // pred_region
          %s480 = sand.u32 %s83, 1
          %s481 = scalar_lea.sflag [#allocation4], %s480
          %s482 = sand.u32 %s83, 1
          %s483 = smul.addr %s482, 8
          %s484 = scalar_lea.vmem [#allocation7], %s483
          %485 = dma.done %s481, 128
        $region48: #{tpu_custom_call.1} parent=43 // pred_fallthru
          _
      $region44: #{tpu_custom_call.1} parent=5 // pred_fallthru
        _
    $region6: #{tpu_custom_call.1} parent=1 // loop_footer
      %s21 = sadd.s32 1, %s17
    $region7: #{tpu_custom_call.1} parent=1 // loop_footer_branch
      %16 = sbr.rel target = $region3
    $region8: #{tpu_custom_call.1} parent=1 // loop_exit
      _
    %486 = vsyncpa [#allocation3], 1
    %s487 = scalar_lea.sflag [#allocation3], 1
    %488 = vsyncpa %s487, 1
    %489 = vsyncpa [#allocation6], 1
    %s490 = scalar_lea.sflag [#allocation6], 1
    %491 = vsyncpa %s490, 1
    %492 = vsyncpa [#allocation4], 1
    %s493 = scalar_lea.sflag [#allocation4], 1
    %494 = vsyncpa %s493, 1

</llo_original>
